<compile_context>
chip_gen: v7x
topology: tpu7x:2x2x1
jax: 0.10.0
libtpu: 0.0.40
codegen_flags: <defaults>
</compile_context>

<pallas_src>
import functools

import jax
import jax.numpy as jnp
from jax.experimental import pallas as pl
from jax.experimental.pallas import tpu as pltpu

IGNORE_INDEX = -100


def _round_up(x, m):
    return ((x + m - 1) // m) * m


def _dynamic_naive_loss_kernel(split_ref, logits_ref, tgt_ref,
                               wl_ref, l_ref, cnt_ref, w_ref,
                               acc_wl, acc_l, acc_c, acc_w,
                               *, ignore_index, img_h, num_classes, tile_rows):
    """One (batch, row-tile) step: CE + dynamic weights, vector-accumulated.

    logits_ref: (C, th, W) block, tgt_ref: (th, W) block.
    Per-batch partials are reduced & stored at the last row-tile of the batch.
    """
    n = pl.program_id(0)          # batch index
    i = pl.program_id(1)          # row-tile index

    @pl.when(i == 0)
    def _():
        acc_wl[...] = jnp.zeros_like(acc_wl)
        acc_l[...] = jnp.zeros_like(acc_l)
        acc_c[...] = jnp.zeros_like(acc_c)
        acc_w[...] = jnp.zeros_like(acc_w)

    tgt = tgt_ref[...]                                   # (th, W) int32

    # Ragged-tail mask: rows beyond the image height hold garbage (both logits
    # and targets), so mask them out explicitly against the static H.
    row = jax.lax.broadcasted_iota(jnp.int32, tgt.shape, 0) + i * tile_rows
    in_bounds = row < img_h
    valid = jnp.logical_and(in_bounds, tgt != ignore_index)
    validf = valid.astype(jnp.float32)

    # Pass 1: class-wise running max, one (th, W) slice at a time
    # (per-slice f32 cast; no whole (C, th, W) f32 temporary).
    m = logits_ref[0].astype(jnp.float32)
    for c in range(1, num_classes):
        m = jnp.maximum(m, logits_ref[c].astype(jnp.float32))

    # Pass 2: fused exp-sum + one-hot gather of the target-class logit.
    # (tgt == c is never true at ignored pixels since ignore_index < 0.)
    sumexp = jnp.zeros_like(m)
    logit_t = jnp.zeros_like(m)
    for c in range(num_classes):
        lc = logits_ref[c].astype(jnp.float32)
        sumexp = sumexp + jnp.exp(lc - m)
        logit_t = jnp.where(tgt == c, lc, logit_t)

    ce = (m + jnp.log(sumexp)) - logit_t                 # -log_softmax[target]
    loss = jnp.where(valid, ce, 0.0)                     # NaN-safe select

    acc_l[...] += loss                                   # sum(loss)
    acc_c[...] += validf                                 # #valid pixels

    use_dyn = n < split_ref[0]                           # uniform per tile

    @pl.when(use_dyn)
    def _():
        # p_target**5 == exp(-5 * ce); no extra exp/reciprocal needed.
        w = jnp.where(valid, jnp.exp(-5.0 * ce), 0.0)
        acc_wl[...] += loss * w                          # sum(loss * w)
        acc_w[...] += w                                  # sum(w over valid)

    @pl.when(jnp.logical_not(use_dyn))
    def _():
        acc_wl[...] += loss                              # weight == 1
        acc_w[...] += validf

    @pl.when(i == pl.num_programs(1) - 1)
    def _():
        wl_ref[...] = jnp.sum(acc_wl[...], keepdims=True).reshape(1, 1, 1)
        l_ref[...] = jnp.sum(acc_l[...], keepdims=True).reshape(1, 1, 1)
        cnt_ref[...] = jnp.sum(acc_c[...], keepdims=True).reshape(1, 1, 1)
        w_ref[...] = jnp.sum(acc_w[...], keepdims=True).reshape(1, 1, 1)


def dynamic_naive_loss(inputs, targets, split_index=None,
                       ignore_index=IGNORE_INDEX, tile_rows=None):
    """JAX/Pallas equivalent of DynamicNaiveLoss.forward.

    inputs:  (N, C, H, W) logits (f32 / bf16; kernel computes in f32 — feeding
             bf16 halves HBM traffic, the main win on v5e/v6e)
    targets: (N, H, W) or (N, T, H, W) integer labels (ignore_index allowed)
    split_index: batches [0, split_index) get p_target**5 weights, rest get 1
    """
    N, C, H, W = inputs.shape
    if targets.ndim == 4:
        real_targets = targets[:, 0, :, :]
    else:
        real_targets = targets
    real_targets = real_targets.astype(jnp.int32)

    itemsize = jnp.dtype(inputs.dtype).itemsize
    align = 16 if itemsize == 2 else 8          # packed sublanes for 16-bit
    w_pad = _round_up(W, 128)                   # lane-padded width (VMEM only)

    # --- per-generation VMEM budget -----------------------------------------
    vmem_cap = 128 * 1024 * 1024
    try:
        info = pltpu.get_tpu_info()
        vmem_cap = int(getattr(info, "vmem_capacity_bytes", vmem_cap))
    except Exception:
        pass
    if vmem_cap <= 64 * 1024 * 1024:            # v7x-class: 64 MiB / TC
        target_block = 5 * 1024 * 1024
        vmem_limit_cap = 48 * 1024 * 1024
    else:                                       # v5e / v6e: 128 MiB
        target_block = 8 * 1024 * 1024
        vmem_limit_cap = 100 * 1024 * 1024

    # --- row-tile selection (multiple of 8/16 rows, or the full height) -----
    if tile_rows is None:
        th = target_block // max(C * w_pad * itemsize, 1)
    else:
        th = int(tile_rows)
    th = max(align, (th // align) * align)
    if th >= H:
        th = H                                  # full extent is always legal
    num_row_tiles = -(-H // th)                 # cdiv; ragged tail masked

    split_val = 0 if split_index is None else int(split_index)
    split_arr = jnp.array([split_val], dtype=jnp.int32)

    # --- explicit VMEM budget (double-buffered inputs + accumulators) -------
    th_pad = _round_up(th, align)
    logits_blk = C * th_pad * w_pad * itemsize
    tgt_blk = _round_up(th, 8) * w_pad * 4
    acc_blk = _round_up(th, 8) * w_pad * 4
    vmem_est = 2 * (logits_blk + tgt_blk) + 4 * acc_blk + (4 << 20)
    vmem_limit = int(min(max(vmem_est, 8 << 20), vmem_limit_cap))

    out_spec = pl.BlockSpec((1, 1, 1), lambda n, i, s: (n, 0, 0))
    kern = functools.partial(_dynamic_naive_loss_kernel,
                             ignore_index=ignore_index, img_h=H,
                             num_classes=C, tile_rows=th)

    wl, lsum, cnt, wsum = pl.pallas_call(
        kern,
        out_shape=tuple(jax.ShapeDtypeStruct((N, 1, 1), jnp.float32)
                        for _ in range(4)),
        grid_spec=pltpu.PrefetchScalarGridSpec(
            num_scalar_prefetch=1,
            grid=(N, num_row_tiles),
            in_specs=[
                # logits (N, C, H, W) -> kernel sees (C, th, W)
                pl.BlockSpec((pl.Squeezed(), C, th, W),
                             lambda n, i, s: (n, 0, i, 0)),
                # targets (N, H, W) -> kernel sees (th, W)
                pl.BlockSpec((pl.Squeezed(), th, W),
                             lambda n, i, s: (n, i, 0)),
            ],
            out_specs=[out_spec, out_spec, out_spec, out_spec],
            scratch_shapes=[pltpu.VMEM((th, W), jnp.float32)
                            for _ in range(4)],
        ),
        compiler_params=pltpu.CompilerParams(
            dimension_semantics=("parallel", "arbitrary"),
            vmem_limit_bytes=vmem_limit),
    )(split_arr, inputs, real_targets)

    # tiny N-way reductions of the per-batch partials (wrapper side)
    wl_tot = jnp.sum(wl)
    l_tot = jnp.sum(lsum)
    c_tot = jnp.sum(cnt)
    w_tot = jnp.sum(wsum)

    loss_stat = l_tot / c_tot
    if split_index is None:
        total_loss = loss_stat
        avg_weights = jnp.float32(1.0)
    else:
        total_loss = wl_tot / c_tot
        avg_weights = w_tot / c_tot

    # TODO(synk): PyTorch returns stats via .item() (host floats); we return
    # device scalars so the wrapper stays jit-compatible.
    stats = {
        'disagree': -1,
        'current_win': -1,
        'avg_weights': avg_weights,
        'loss': loss_stat,
    }
    return total_loss, stats


def _reference(inputs, targets, split_index, ignore_index=IGNORE_INDEX):
    """Pure-JAX reference matching the PyTorch semantics. Returns (loss, avg_w)."""
    real = targets[:, 0] if targets.ndim == 4 else targets
    real = real.astype(jnp.int32)
    N = inputs.shape[0]
    logp = jax.nn.log_softmax(inputs.astype(jnp.float32), axis=1)
    valid = real != ignore_index
    t_safe = jnp.where(valid, real, 0)
    ll = jnp.take_along_axis(logp, t_safe[:, None], axis=1)[:, 0]   # (N, H, W)
    loss = jnp.where(valid, -ll, 0.0)
    cnt = valid.sum()
    if split_index is None:
        return loss.sum() / cnt, jnp.float32(1.0)
    p = jnp.exp(ll)
    w = p ** 5
    batch = jnp.arange(N)[:, None, None]
    w = jnp.where(batch < split_index, w, 1.0)
    avg_w = jnp.where(valid, w, 0.0).sum() / cnt
    return (loss * w).sum() / cnt, avg_w


if __name__ == "__main__":
    key = jax.random.PRNGKey(0)
    k1, k2, k3 = jax.random.split(key, 3)

    N, C, H, W = 2, 4, 16, 16
    inputs = jax.random.normal(k1, (N, C, H, W), dtype=jnp.float32)
    labels = jax.random.randint(k2, (N, H, W), 0, C, dtype=jnp.int32)
    ignore_mask = jax.random.bernoulli(k3, 0.1, (N, H, W))
    labels = jnp.where(ignore_mask, IGNORE_INDEX, labels)
    # module also accepts 4-D targets (N, T, H, W); use that form here
    targets = labels[:, None, :, :]

    # --- split_index given: dynamic p**5 weights on batches [0, split_index) ---
    loss_dyn, stats_dyn = dynamic_naive_loss(inputs, targets, split_index=1)
    jax.block_until_ready(loss_dyn)
    ref_dyn, ref_avg_w = _reference(inputs, targets, split_index=1)
    assert jnp.allclose(loss_dyn, ref_dyn, rtol=1e-5, atol=1e-5), (loss_dyn, ref_dyn)
    assert jnp.allclose(stats_dyn['avg_weights'], ref_avg_w, rtol=1e-5, atol=1e-5), (
        stats_dyn['avg_weights'], ref_avg_w)

    # --- split_index None: plain mean CE over valid pixels ---
    loss_plain, stats_plain = dynamic_naive_loss(inputs, targets, split_index=None)
    jax.block_until_ready(loss_plain)
    ref_plain, _ = _reference(inputs, targets, split_index=None)
    assert jnp.allclose(loss_plain, ref_plain, rtol=1e-5, atol=1e-5), (loss_plain, ref_plain)

    # --- bf16 logits path (no wrapper upcast; kernel computes in f32) ---
    inputs_bf16 = inputs.astype(jnp.bfloat16)
    loss_bf, _ = dynamic_naive_loss(inputs_bf16, targets, split_index=1)
    jax.block_until_ready(loss_bf)
    ref_bf, _ = _reference(inputs_bf16, targets, split_index=1)
    assert jnp.allclose(loss_bf, ref_bf, rtol=1e-4, atol=1e-4), (loss_bf, ref_bf)

    # --- multi-row-tile + ragged tail path (3-D targets, H not a tile multiple) ---
    N2, C2, H2, W2 = 2, 4, 50, 48
    k4, k5, k6 = jax.random.split(jax.random.PRNGKey(1), 3)
    inputs2 = jax.random.normal(k4, (N2, C2, H2, W2), dtype=jnp.float32)
    labels2 = jax.random.randint(k5, (N2, H2, W2), 0, C2, dtype=jnp.int32)
    labels2 = jnp.where(jax.random.bernoulli(k6, 0.1, (N2, H2, W2)),
                        IGNORE_INDEX, labels2)
    loss2, _ = dynamic_naive_loss(inputs2, labels2, split_index=1, tile_rows=16)
    jax.block_until_ready(loss2)
    ref2, _ = _reference(inputs2, labels2, split_index=1)
    assert jnp.allclose(loss2, ref2, rtol=1e-5, atol=1e-5), (loss2, ref2)

    print("KERNEL_OK")
</pallas_src>

<mosaic_0001>
module attributes {stable_mosaic.version = 11 : i64} {
  func.func @_dynamic_naive_loss_kernel(%arg0: i32, %arg1: i32, %arg2: memref<1xi32, #tpu.memory_space<smem>>, %arg3: memref<1x4x16x16xf32, #tpu.memory_space<vmem>>, %arg4: memref<1x16x16xi32, #tpu.memory_space<vmem>>, %arg5: memref<1x1x1xf32, #tpu.memory_space<vmem>>, %arg6: memref<1x1x1xf32, #tpu.memory_space<vmem>>, %arg7: memref<1x1x1xf32, #tpu.memory_space<vmem>>, %arg8: memref<1x1x1xf32, #tpu.memory_space<vmem>>, %arg9: memref<16x16xf32, #tpu.memory_space<vmem>>, %arg10: memref<16x16xf32, #tpu.memory_space<vmem>>, %arg11: memref<16x16xf32, #tpu.memory_space<vmem>>, %arg12: memref<16x16xf32, #tpu.memory_space<vmem>>) attributes {dimension_semantics = [#tpu.dimension_semantics<parallel>, #tpu.dimension_semantics<arbitrary>], iteration_bounds = array<i64: 2, 1>, scalar_prefetch = 1 : i64, scratch_operands = 4 : i64, tpu.core_type = #tpu.core_type<tc>, window_params = [{transform_indices = @transform_0, window_bounds = array<i64: 1, 4, 16, 16>}, {transform_indices = @transform_1, window_bounds = array<i64: 1, 16, 16>}, {transform_indices = @transform_2, window_bounds = array<i64: 1, 1, 1>}, {transform_indices = @transform_3, window_bounds = array<i64: 1, 1, 1>}, {transform_indices = @transform_4, window_bounds = array<i64: 1, 1, 1>}, {transform_indices = @transform_5, window_bounds = array<i64: 1, 1, 1>}]} {
    %c0_i32 = arith.constant 0 : i32
    %0 = arith.cmpi eq, %arg1, %c0_i32 : i32
    %1 = arith.extui %0 : i1 to i32
    %c0_i32_0 = arith.constant 0 : i32
    %2 = arith.cmpi ne, %1, %c0_i32_0 : i32
    scf.if %2 {
      %cst_49 = arith.constant 0.000000e+00 : f32
      %82 = vector.broadcast %cst_49 : f32 to vector<16x16xf32>
      %c0_50 = arith.constant 0 : index
      %c0_51 = arith.constant 0 : index
      %83 = vector.load %arg9[%c0_50, %c0_51] : memref<16x16xf32, #tpu.memory_space<vmem>>, vector<16x16xf32>
      tpu.vector_store %arg9[%c0_50, %c0_51], %82 {strides = array<i32>} : memref<16x16xf32, #tpu.memory_space<vmem>>, vector<16x16xf32>,
      %cst_52 = arith.constant 0.000000e+00 : f32
      %84 = vector.broadcast %cst_52 : f32 to vector<16x16xf32>
      %c0_53 = arith.constant 0 : index
      %c0_54 = arith.constant 0 : index
      %85 = vector.load %arg10[%c0_53, %c0_54] : memref<16x16xf32, #tpu.memory_space<vmem>>, vector<16x16xf32>
      tpu.vector_store %arg10[%c0_53, %c0_54], %84 {strides = array<i32>} : memref<16x16xf32, #tpu.memory_space<vmem>>, vector<16x16xf32>,
      %cst_55 = arith.constant 0.000000e+00 : f32
      %86 = vector.broadcast %cst_55 : f32 to vector<16x16xf32>
      %c0_56 = arith.constant 0 : index
      %c0_57 = arith.constant 0 : index
      %87 = vector.load %arg11[%c0_56, %c0_57] : memref<16x16xf32, #tpu.memory_space<vmem>>, vector<16x16xf32>
      tpu.vector_store %arg11[%c0_56, %c0_57], %86 {strides = array<i32>} : memref<16x16xf32, #tpu.memory_space<vmem>>, vector<16x16xf32>,
      %cst_58 = arith.constant 0.000000e+00 : f32
      %88 = vector.broadcast %cst_58 : f32 to vector<16x16xf32>
      %c0_59 = arith.constant 0 : index
      %c0_60 = arith.constant 0 : index
      %89 = vector.load %arg12[%c0_59, %c0_60] : memref<16x16xf32, #tpu.memory_space<vmem>>, vector<16x16xf32>
      tpu.vector_store %arg12[%c0_59, %c0_60], %88 {strides = array<i32>} : memref<16x16xf32, #tpu.memory_space<vmem>>, vector<16x16xf32>,
    } else {
    }
    %c0 = arith.constant 0 : index
    %c0_1 = arith.constant 0 : index
    %c0_2 = arith.constant 0 : index
    %3 = vector.load %arg4[%c0, %c0_1, %c0_2] : memref<1x16x16xi32, #tpu.memory_space<vmem>>, vector<1x16x16xi32>
    %4 = vector.shape_cast %3 : vector<1x16x16xi32> to vector<16x16xi32>
    %5 = tpu.iota {dimensions = array<i32: 0>} : vector<16x16xi32>
    %c16_i32 = arith.constant 16 : i32
    %6 = arith.muli %arg1, %c16_i32 : i32
    %7 = vector.broadcast %6 : i32 to vector<16x16xi32>
    %8 = arith.addi %5, %7 : vector<16x16xi32>
    %c16_i32_3 = arith.constant 16 : i32
    %9 = vector.broadcast %c16_i32_3 : i32 to vector<16x16xi32>
    %10 = arith.cmpi slt, %8, %9 : vector<16x16xi32>
    %c-100_i32 = arith.constant -100 : i32
    %11 = vector.broadcast %c-100_i32 : i32 to vector<16x16xi32>
    %12 = arith.cmpi ne, %4, %11 : vector<16x16xi32>
    %13 = arith.andi %10, %12 : vector<16x16xi1>
    %14 = arith.extui %13 : vector<16x16xi1> to vector<16x16xi32>
    %15 = arith.sitofp %14 : vector<16x16xi32> to vector<16x16xf32>
    %c0_4 = arith.constant 0 : index
    %c0_5 = arith.constant 0 : index
    %c0_6 = arith.constant 0 : index
    %c0_7 = arith.constant 0 : index
    %16 = vector.load %arg3[%c0_4, %c0_5, %c0_6, %c0_7] : memref<1x4x16x16xf32, #tpu.memory_space<vmem>>, vector<1x1x16x16xf32>
    %17 = vector.shape_cast %16 : vector<1x1x16x16xf32> to vector<16x16xf32>
    %c0_8 = arith.constant 0 : index
    %c1 = arith.constant 1 : index
    %c0_9 = arith.constant 0 : index
    %c0_10 = arith.constant 0 : index
    %18 = vector.load %arg3[%c0_8, %c1, %c0_9, %c0_10] : memref<1x4x16x16xf32, #tpu.memory_space<vmem>>, vector<1x1x16x16xf32>
    %19 = vector.shape_cast %18 : vector<1x1x16x16xf32> to vector<16x16xf32>
    %20 = arith.maximumf %17, %19 : vector<16x16xf32>
    %c0_11 = arith.constant 0 : index
    %c2 = arith.constant 2 : index
    %c0_12 = arith.constant 0 : index
    %c0_13 = arith.constant 0 : index
    %21 = vector.load %arg3[%c0_11, %c2, %c0_12, %c0_13] : memref<1x4x16x16xf32, #tpu.memory_space<vmem>>, vector<1x1x16x16xf32>
    %22 = vector.shape_cast %21 : vector<1x1x16x16xf32> to vector<16x16xf32>
    %23 = arith.maximumf %20, %22 : vector<16x16xf32>
    %c0_14 = arith.constant 0 : index
    %c3 = arith.constant 3 : index
    %c0_15 = arith.constant 0 : index
    %c0_16 = arith.constant 0 : index
    %24 = vector.load %arg3[%c0_14, %c3, %c0_15, %c0_16] : memref<1x4x16x16xf32, #tpu.memory_space<vmem>>, vector<1x1x16x16xf32>
    %25 = vector.shape_cast %24 : vector<1x1x16x16xf32> to vector<16x16xf32>
    %26 = arith.maximumf %23, %25 : vector<16x16xf32>
    %cst = arith.constant 0.000000e+00 : f32
    %27 = vector.broadcast %cst : f32 to vector<16x16xf32>
    %cst_17 = arith.constant 0.000000e+00 : f32
    %28 = vector.broadcast %cst_17 : f32 to vector<16x16xf32>
    %c0_18 = arith.constant 0 : index
    %c0_19 = arith.constant 0 : index
    %c0_20 = arith.constant 0 : index
    %c0_21 = arith.constant 0 : index
    %29 = vector.load %arg3[%c0_18, %c0_19, %c0_20, %c0_21] : memref<1x4x16x16xf32, #tpu.memory_space<vmem>>, vector<1x1x16x16xf32>
    %30 = vector.shape_cast %29 : vector<1x1x16x16xf32> to vector<16x16xf32>
    %31 = arith.subf %30, %26 : vector<16x16xf32>
    %32 = math.exp %31 : vector<16x16xf32>
    %33 = arith.addf %27, %32 : vector<16x16xf32>
    %c0_i32_22 = arith.constant 0 : i32
    %34 = vector.broadcast %c0_i32_22 : i32 to vector<16x16xi32>
    %35 = arith.cmpi eq, %4, %34 : vector<16x16xi32>
    %36 = arith.select %35, %30, %28 : vector<16x16xi1>, vector<16x16xf32>
    %c0_23 = arith.constant 0 : index
    %c1_24 = arith.constant 1 : index
    %c0_25 = arith.constant 0 : index
    %c0_26 = arith.constant 0 : index
    %37 = vector.load %arg3[%c0_23, %c1_24, %c0_25, %c0_26] : memref<1x4x16x16xf32, #tpu.memory_space<vmem>>, vector<1x1x16x16xf32>
    %38 = vector.shape_cast %37 : vector<1x1x16x16xf32> to vector<16x16xf32>
    %39 = arith.subf %38, %26 : vector<16x16xf32>
    %40 = math.exp %39 : vector<16x16xf32>
    %41 = arith.addf %33, %40 : vector<16x16xf32>
    %c1_i32 = arith.constant 1 : i32
    %42 = vector.broadcast %c1_i32 : i32 to vector<16x16xi32>
    %43 = arith.cmpi eq, %4, %42 : vector<16x16xi32>
    %44 = arith.select %43, %38, %36 : vector<16x16xi1>, vector<16x16xf32>
    %c0_27 = arith.constant 0 : index
    %c2_28 = arith.constant 2 : index
    %c0_29 = arith.constant 0 : index
    %c0_30 = arith.constant 0 : index
    %45 = vector.load %arg3[%c0_27, %c2_28, %c0_29, %c0_30] : memref<1x4x16x16xf32, #tpu.memory_space<vmem>>, vector<1x1x16x16xf32>
    %46 = vector.shape_cast %45 : vector<1x1x16x16xf32> to vector<16x16xf32>
    %47 = arith.subf %46, %26 : vector<16x16xf32>
    %48 = math.exp %47 : vector<16x16xf32>
    %49 = arith.addf %41, %48 : vector<16x16xf32>
    %c2_i32 = arith.constant 2 : i32
    %50 = vector.broadcast %c2_i32 : i32 to vector<16x16xi32>
    %51 = arith.cmpi eq, %4, %50 : vector<16x16xi32>
    %52 = arith.select %51, %46, %44 : vector<16x16xi1>, vector<16x16xf32>
    %c0_31 = arith.constant 0 : index
    %c3_32 = arith.constant 3 : index
    %c0_33 = arith.constant 0 : index
    %c0_34 = arith.constant 0 : index
    %53 = vector.load %arg3[%c0_31, %c3_32, %c0_33, %c0_34] : memref<1x4x16x16xf32, #tpu.memory_space<vmem>>, vector<1x1x16x16xf32>
    %54 = vector.shape_cast %53 : vector<1x1x16x16xf32> to vector<16x16xf32>
    %55 = arith.subf %54, %26 : vector<16x16xf32>
    %56 = math.exp %55 : vector<16x16xf32>
    %57 = arith.addf %49, %56 : vector<16x16xf32>
    %c3_i32 = arith.constant 3 : i32
    %58 = vector.broadcast %c3_i32 : i32 to vector<16x16xi32>
    %59 = arith.cmpi eq, %4, %58 : vector<16x16xi32>
    %60 = arith.select %59, %54, %52 : vector<16x16xi1>, vector<16x16xf32>
    %61 = math.log %57 : vector<16x16xf32>
    %62 = arith.addf %26, %61 : vector<16x16xf32>
    %63 = arith.subf %62, %60 : vector<16x16xf32>
    %cst_35 = arith.constant 0.000000e+00 : f32
    %64 = vector.broadcast %cst_35 : f32 to vector<16x16xf32>
    %65 = arith.select %13, %63, %64 : vector<16x16xi1>, vector<16x16xf32>
    %c0_36 = arith.constant 0 : index
    %c0_37 = arith.constant 0 : index
    %66 = vector.load %arg10[%c0_36, %c0_37] : memref<16x16xf32, #tpu.memory_space<vmem>>, vector<16x16xf32>
    %67 = arith.addf %66, %65 : vector<16x16xf32>
    %c0_38 = arith.constant 0 : index
    %c0_39 = arith.constant 0 : index
    %68 = vector.load %arg10[%c0_38, %c0_39] : memref<16x16xf32, #tpu.memory_space<vmem>>, vector<16x16xf32>
    tpu.vector_store %arg10[%c0_38, %c0_39], %67 {strides = array<i32>} : memref<16x16xf32, #tpu.memory_space<vmem>>, vector<16x16xf32>,
    %c0_40 = arith.constant 0 : index
    %c0_41 = arith.constant 0 : index
    %69 = vector.load %arg11[%c0_40, %c0_41] : memref<16x16xf32, #tpu.memory_space<vmem>>, vector<16x16xf32>
    %70 = arith.addf %69, %15 : vector<16x16xf32>
    %c0_42 = arith.constant 0 : index
    %c0_43 = arith.constant 0 : index
    %71 = vector.load %arg11[%c0_42, %c0_43] : memref<16x16xf32, #tpu.memory_space<vmem>>, vector<16x16xf32>
    tpu.vector_store %arg11[%c0_42, %c0_43], %70 {strides = array<i32>} : memref<16x16xf32, #tpu.memory_space<vmem>>, vector<16x16xf32>,
    %c0_44 = arith.constant 0 : index
    %72 = memref.load %arg2[%c0_44] : memref<1xi32, #tpu.memory_space<smem>>
    %73 = arith.cmpi slt, %arg0, %72 : i32
    %74 = arith.extui %73 : i1 to i32
    %c0_i32_45 = arith.constant 0 : i32
    %75 = arith.cmpi ne, %74, %c0_i32_45 : i32
    scf.if %75 {
      %cst_49 = arith.constant -5.000000e+00 : f32
      %82 = vector.broadcast %cst_49 : f32 to vector<16x16xf32>
      %83 = arith.mulf %82, %63 : vector<16x16xf32>
      %84 = math.exp %83 : vector<16x16xf32>
      %cst_50 = arith.constant 0.000000e+00 : f32
      %85 = vector.broadcast %cst_50 : f32 to vector<16x16xf32>
      %86 = arith.select %13, %84, %85 : vector<16x16xi1>, vector<16x16xf32>
      %c0_51 = arith.constant 0 : index
      %c0_52 = arith.constant 0 : index
      %87 = vector.load %arg9[%c0_51, %c0_52] : memref<16x16xf32, #tpu.memory_space<vmem>>, vector<16x16xf32>
      %88 = arith.mulf %65, %86 : vector<16x16xf32>
      %89 = arith.addf %87, %88 : vector<16x16xf32>
      %c0_53 = arith.constant 0 : index
      %c0_54 = arith.constant 0 : index
      %90 = vector.load %arg9[%c0_53, %c0_54] : memref<16x16xf32, #tpu.memory_space<vmem>>, vector<16x16xf32>
      tpu.vector_store %arg9[%c0_53, %c0_54], %89 {strides = array<i32>} : memref<16x16xf32, #tpu.memory_space<vmem>>, vector<16x16xf32>,
      %c0_55 = arith.constant 0 : index
      %c0_56 = arith.constant 0 : index
      %91 = vector.load %arg12[%c0_55, %c0_56] : memref<16x16xf32, #tpu.memory_space<vmem>>, vector<16x16xf32>
      %92 = arith.addf %91, %86 : vector<16x16xf32>
      %c0_57 = arith.constant 0 : index
      %c0_58 = arith.constant 0 : index
      %93 = vector.load %arg12[%c0_57, %c0_58] : memref<16x16xf32, #tpu.memory_space<vmem>>, vector<16x16xf32>
      tpu.vector_store %arg12[%c0_57, %c0_58], %92 {strides = array<i32>} : memref<16x16xf32, #tpu.memory_space<vmem>>, vector<16x16xf32>,
    } else {
    }
    %true = arith.constant true
    %76 = arith.xori %73, %true : i1
    %77 = arith.extui %76 : i1 to i32
    %c0_i32_46 = arith.constant 0 : i32
    %78 = arith.cmpi ne, %77, %c0_i32_46 : i32
    scf.if %78 {
      %c0_49 = arith.constant 0 : index
      %c0_50 = arith.constant 0 : index
      %82 = vector.load %arg9[%c0_49, %c0_50] : memref<16x16xf32, #tpu.memory_space<vmem>>, vector<16x16xf32>
      %83 = arith.addf %82, %65 : vector<16x16xf32>
      %c0_51 = arith.constant 0 : index
      %c0_52 = arith.constant 0 : index
      %84 = vector.load %arg9[%c0_51, %c0_52] : memref<16x16xf32, #tpu.memory_space<vmem>>, vector<16x16xf32>
      tpu.vector_store %arg9[%c0_51, %c0_52], %83 {strides = array<i32>} : memref<16x16xf32, #tpu.memory_space<vmem>>, vector<16x16xf32>,
      %c0_53 = arith.constant 0 : index
      %c0_54 = arith.constant 0 : index
      %85 = vector.load %arg12[%c0_53, %c0_54] : memref<16x16xf32, #tpu.memory_space<vmem>>, vector<16x16xf32>
      %86 = arith.addf %85, %15 : vector<16x16xf32>
      %c0_55 = arith.constant 0 : index
      %c0_56 = arith.constant 0 : index
      %87 = vector.load %arg12[%c0_55, %c0_56] : memref<16x16xf32, #tpu.memory_space<vmem>>, vector<16x16xf32>
      tpu.vector_store %arg12[%c0_55, %c0_56], %86 {strides = array<i32>} : memref<16x16xf32, #tpu.memory_space<vmem>>, vector<16x16xf32>,
    } else {
    }
    %c0_i32_47 = arith.constant 0 : i32
    %79 = arith.cmpi eq, %arg1, %c0_i32_47 : i32
    %80 = arith.extui %79 : i1 to i32
    %c0_i32_48 = arith.constant 0 : i32
    %81 = arith.cmpi ne, %80, %c0_i32_48 : i32
    scf.if %81 {
      %c0_49 = arith.constant 0 : index
      %c0_50 = arith.constant 0 : index
      %82 = vector.load %arg9[%c0_49, %c0_50] : memref<16x16xf32, #tpu.memory_space<vmem>>, vector<16x16xf32>
      %83 = vector.shape_cast %82 : vector<16x16xf32> to vector<1x16x16xf32>
      %cst_51 = arith.constant dense<0.000000e+00> : vector<1xf32>
      %84 = vector.multi_reduction <add>, %83, %cst_51 [1, 2] : vector<1x16x16xf32> to vector<1xf32>
      %85 = vector.shape_cast %84 : vector<1xf32> to vector<1x1x1xf32>
      %86 = vector.extract %85[0, 0, 0] : f32 from vector<1x1x1xf32>
      %87 = vector.broadcast %86 : f32 to vector<1x1xf32>
      %88 = vector.shape_cast %87 : vector<1x1xf32> to vector<1x1x1xf32>
      %c0_52 = arith.constant 0 : index
      %c0_53 = arith.constant 0 : index
      %c0_54 = arith.constant 0 : index
      %89 = vector.load %arg5[%c0_52, %c0_53, %c0_54] : memref<1x1x1xf32, #tpu.memory_space<vmem>>, vector<1x1x1xf32>
      tpu.vector_store %arg5[%c0_52, %c0_53, %c0_54], %88 {strides = array<i32>} : memref<1x1x1xf32, #tpu.memory_space<vmem>>, vector<1x1x1xf32>,
      %c0_55 = arith.constant 0 : index
      %c0_56 = arith.constant 0 : index
      %90 = vector.load %arg10[%c0_55, %c0_56] : memref<16x16xf32, #tpu.memory_space<vmem>>, vector<16x16xf32>
      %91 = vector.shape_cast %90 : vector<16x16xf32> to vector<1x16x16xf32>
      %cst_57 = arith.constant dense<0.000000e+00> : vector<1xf32>
      %92 = vector.multi_reduction <add>, %91, %cst_57 [1, 2] : vector<1x16x16xf32> to vector<1xf32>
      %93 = vector.shape_cast %92 : vector<1xf32> to vector<1x1x1xf32>
      %94 = vector.extract %93[0, 0, 0] : f32 from vector<1x1x1xf32>
      %95 = vector.broadcast %94 : f32 to vector<1x1xf32>
      %96 = vector.shape_cast %95 : vector<1x1xf32> to vector<1x1x1xf32>
      %c0_58 = arith.constant 0 : index
      %c0_59 = arith.constant 0 : index
      %c0_60 = arith.constant 0 : index
      %97 = vector.load %arg6[%c0_58, %c0_59, %c0_60] : memref<1x1x1xf32, #tpu.memory_space<vmem>>, vector<1x1x1xf32>
      tpu.vector_store %arg6[%c0_58, %c0_59, %c0_60], %96 {strides = array<i32>} : memref<1x1x1xf32, #tpu.memory_space<vmem>>, vector<1x1x1xf32>,
      %c0_61 = arith.constant 0 : index
      %c0_62 = arith.constant 0 : index
      %98 = vector.load %arg11[%c0_61, %c0_62] : memref<16x16xf32, #tpu.memory_space<vmem>>, vector<16x16xf32>
      %99 = vector.shape_cast %98 : vector<16x16xf32> to vector<1x16x16xf32>
      %cst_63 = arith.constant dense<0.000000e+00> : vector<1xf32>
      %100 = vector.multi_reduction <add>, %99, %cst_63 [1, 2] : vector<1x16x16xf32> to vector<1xf32>
      %101 = vector.shape_cast %100 : vector<1xf32> to vector<1x1x1xf32>
      %102 = vector.extract %101[0, 0, 0] : f32 from vector<1x1x1xf32>
      %103 = vector.broadcast %102 : f32 to vector<1x1xf32>
      %104 = vector.shape_cast %103 : vector<1x1xf32> to vector<1x1x1xf32>
      %c0_64 = arith.constant 0 : index
      %c0_65 = arith.constant 0 : index
      %c0_66 = arith.constant 0 : index
      %105 = vector.load %arg7[%c0_64, %c0_65, %c0_66] : memref<1x1x1xf32, #tpu.memory_space<vmem>>, vector<1x1x1xf32>
      tpu.vector_store %arg7[%c0_64, %c0_65, %c0_66], %104 {strides = array<i32>} : memref<1x1x1xf32, #tpu.memory_space<vmem>>, vector<1x1x1xf32>,
      %c0_67 = arith.constant 0 : index
      %c0_68 = arith.constant 0 : index
      %106 = vector.load %arg12[%c0_67, %c0_68] : memref<16x16xf32, #tpu.memory_space<vmem>>, vector<16x16xf32>
      %107 = vector.shape_cast %106 : vector<16x16xf32> to vector<1x16x16xf32>
      %cst_69 = arith.constant dense<0.000000e+00> : vector<1xf32>
      %108 = vector.multi_reduction <add>, %107, %cst_69 [1, 2] : vector<1x16x16xf32> to vector<1xf32>
      %109 = vector.shape_cast %108 : vector<1xf32> to vector<1x1x1xf32>
      %110 = vector.extract %109[0, 0, 0] : f32 from vector<1x1x1xf32>
      %111 = vector.broadcast %110 : f32 to vector<1x1xf32>
      %112 = vector.shape_cast %111 : vector<1x1xf32> to vector<1x1x1xf32>
      %c0_70 = arith.constant 0 : index
      %c0_71 = arith.constant 0 : index
      %c0_72 = arith.constant 0 : index
      %113 = vector.load %arg8[%c0_70, %c0_71, %c0_72] : memref<1x1x1xf32, #tpu.memory_space<vmem>>, vector<1x1x1xf32>
      tpu.vector_store %arg8[%c0_70, %c0_71, %c0_72], %112 {strides = array<i32>} : memref<1x1x1xf32, #tpu.memory_space<vmem>>, vector<1x1x1xf32>,
    } else {
    }
    return
  }
  func.func @transform_0(%arg0: i32, %arg1: i32, %arg2: memref<1xi32, #tpu.memory_space<smem>>) -> (i32, i32, i32, i32) {
    %c0_i32 = arith.constant 0 : i32
    %c0_i32_0 = arith.constant 0 : i32
    %c0_i32_1 = arith.constant 0 : i32
    return %arg0, %c0_i32, %arg1, %c0_i32_0 : i32, i32, i32, i32
  }
  func.func @transform_1(%arg0: i32, %arg1: i32, %arg2: memref<1xi32, #tpu.memory_space<smem>>) -> (i32, i32, i32) {
    %c0_i32 = arith.constant 0 : i32
    %c0_i32_0 = arith.constant 0 : i32
    return %arg0, %arg1, %c0_i32 : i32, i32, i32
  }
  func.func @transform_2(%arg0: i32, %arg1: i32, %arg2: memref<1xi32, #tpu.memory_space<smem>>) -> (i32, i32, i32) {
    %c0_i32 = arith.constant 0 : i32
    %c0_i32_0 = arith.constant 0 : i32
    %c0_i32_1 = arith.constant 0 : i32
    return %arg0, %c0_i32, %c0_i32_0 : i32, i32, i32
  }
  func.func @transform_3(%arg0: i32, %arg1: i32, %arg2: memref<1xi32, #tpu.memory_space<smem>>) -> (i32, i32, i32) {
    %c0_i32 = arith.constant 0 : i32
    %c0_i32_0 = arith.constant 0 : i32
    %c0_i32_1 = arith.constant 0 : i32
    return %arg0, %c0_i32, %c0_i32_0 : i32, i32, i32
  }
  func.func @transform_4(%arg0: i32, %arg1: i32, %arg2: memref<1xi32, #tpu.memory_space<smem>>) -> (i32, i32, i32) {
    %c0_i32 = arith.constant 0 : i32
    %c0_i32_0 = arith.constant 0 : i32
    %c0_i32_1 = arith.constant 0 : i32
    return %arg0, %c0_i32, %c0_i32_0 : i32, i32, i32
  }
  func.func @transform_5(%arg0: i32, %arg1: i32, %arg2: memref<1xi32, #tpu.memory_space<smem>>) -> (i32, i32, i32) {
    %c0_i32 = arith.constant 0 : i32
    %c0_i32_0 = arith.constant 0 : i32
    %c0_i32_1 = arith.constant 0 : i32
    return %arg0, %c0_i32, %c0_i32_0 : i32, i32, i32
  }
}

</mosaic_0001>

<llo_original>
// kernel: tpu_custom_call.1
$region0: #{tpu_custom_call.1}
  #allocation0 [shape = 'u32[]', space=smem, size = 0x4, offset = 0x4, fixed_abs, tag = 'smem constant byte address 0x4 - core index']
  #allocation1 [shape = 'u32[144,128]{1,0:T(1,128)}', space=vmem, size = 0x12000, scoped, tag = 'internal scratch']
  #allocation2 [shape = 'f32[16,16]{1,0:T(8,128)}', space=vmem, size = 0x2000, scoped, tag = 'scratch operand']
  #allocation3 [shape = 'f32[16,16]{1,0:T(8,128)}', space=vmem, size = 0x2000, scoped, tag = 'scratch operand']
  #allocation4 [shape = 'f32[16,16]{1,0:T(8,128)}', space=vmem, size = 0x2000, scoped, tag = 'scratch operand']
  #allocation5 [shape = 'f32[16,16]{1,0:T(8,128)}', space=vmem, size = 0x2000, scoped, tag = 'scratch operand']
  #allocation6 [shape = 's32[1]{0}', space=sflag, size = 0x4, scoped, tag = 'scoped memory for tpu_custom_call.1']
  #allocation7 [shape = 's32[1]{0:T(128)S(6)}', space=smem, size = 0x200, scoped, tag = 'prefetched SMEM operand 0']
  %s0 = inlined_call_operand.<no memory space> [shape: s32[1], index: 0, kind: input, shape index: {}]
  %s1 = inlined_call_operand.hbm [shape: f32[2,4,16,16], index: 1, kind: input, shape index: {}]
  %s2 = inlined_call_operand.hbm [shape: s32[2,16,16], index: 2, kind: input, shape index: {}]
  %s3 = inlined_call_operand.vmem [shape: f32[2,1,1], index: 3, kind: output, shape index: {0}]
  %s4 = inlined_call_operand.vmem [shape: f32[2,1,1], index: 4, kind: output, shape index: {1}]
  %s5 = inlined_call_operand.vmem [shape: f32[2,1,1], index: 5, kind: output, shape index: {2}]
  %s6 = inlined_call_operand.vmem [shape: f32[2,1,1], index: 6, kind: output, shape index: {3}]
  %7 = xla_tuple %s3, %s4, %s5, %s6
  %s8 = sld [smem:[#allocation0]]
  $region89: #{tpu_custom_call.1} parent=0
    _
  %s10 = ssub.s32 1, %s8
  %s11 = scalar_select 0, %s10, %s8
  %12 = sst [smem:[#allocation7]] %s0
  $region1: #{tpu_custom_call.1} parent=0
    #allocation8 [shape = 'u8[65536]{0}', space=vmem, size = 0x10000, scoped, tag = 'input window, operand 1']
    #allocation9 [shape = 's32[2]{0}', space=sflag, size = 0x8, scoped, tag = 'scoped memory for tpu_custom_call.1']
    #allocation10 [shape = 'u8[16384]{0}', space=vmem, size = 0x4000, scoped, tag = 'input window, operand 2']
    #allocation11 [shape = 's32[2]{0}', space=sflag, size = 0x8, scoped, tag = 'scoped memory for tpu_custom_call.1']
    %13 = vsyncpa [#allocation9], 0
    %s14 = scalar_lea.sflag [#allocation9], 1
    %15 = vsyncpa %s14, 0
    %16 = vsyncpa [#allocation11], 0
    %s17 = scalar_lea.sflag [#allocation11], 1
    %18 = vsyncpa %s17, 0
    loop: start=0, step=1, limit=4
    $region2: #{tpu_custom_call.1} parent=1 // loop_pre_header
      _
    $region3: #{tpu_custom_call.1} parent=1 // loop_header
      %s20 = sphi 0, %s24
      %p21 = scmp.ge.s32.totalorder %s20, 4
      %s27 = sphi 0, %s39
      %s28 = sphi 0, %s35
      %s29 = sphi 0, %s27
      %s30 = sphi 0, %s28
      %s31 = sphi 0, %s29
      %s32 = sphi 0, %s30
      %s44 = sphi 0, %s46
      %s47 = sphi 0, %s44
      %s48 = sphi 0, %s47
      %s64 = sphi 0, %s48
      %s72 = sphi 0, %s74
      %s75 = sphi 0, %s72
      %s76 = sphi 0, %s75
      %s92 = sphi 0, %s76
      %s98 = sphi 0, %s100
      %s101 = sphi 0, %s98
      %s102 = sphi 0, %s101
      %s118 = sphi 0, %s102
      %s124 = sphi 0, %s126
      %s127 = sphi 0, %s124
      %s128 = sphi 0, %s127
      %s144 = sphi 0, %s128
      %s150 = sphi 0, %s152
      %s153 = sphi 0, %s150
      %s154 = sphi 0, %s153
      %s170 = sphi 0, %s154
      %s176 = sphi 0, %s178
      %s179 = sphi 0, %s176
      %s180 = sphi 0, %s179
      %s196 = sphi 0, %s180
    $region4: #{tpu_custom_call.1} parent=1 // loop_header_branch
      %23 = sbr.rel (%p21) target = $region8
    $region5: #{tpu_custom_call.1} parent=1 // loop_body
      %s25 = ssub.s32 %s20, 1
      %s26 = ssub.s32 %s20, 2
      %s33 = sadd.s32 1, %s28
      %p34 = scmp.ge.s32.totalorder %s33, 1
      %s35 = scalar_select %p34, 0, %s33
      %s36 = sadd.s32 1, %s27
      %s37 = scalar_select %p34, %s36, %s27
      %p38 = scmp.ge.s32.totalorder %s37, 2
      %s39 = scalar_select %p38, 0, %s37
      %s40 = ssub.s32 %s27, %s39
      %s41 = ssub.s32 %s28, %s35
      %s42 = sor.u32 %s40, %s41
      %p43 = scmp.eq.s32.totalorder %s42, 0
      %s45 = sadd.s32 %s44, 1
      %s46 = scalar_select %p43, %s44, %s45
      %p49 = pneg %p43
      %p50 = scmp.eq.s32.totalorder %s20, 1
      %p51 = por %p49, %p50
      %p52 = scmp.ne.s32.totalorder %s44, %s47
      %p53 = scmp.eq.s32.totalorder %s20, 0
      %p54 = por %p52, %p53
      %p55 = scmp.ne.s32.totalorder %s44, %s47
      %p56 = scmp.eq.s32.totalorder %s25, 1
      %p57 = por %p55, %p56
      %p58 = scmp.ne.s32.totalorder %s47, %s48
      %p59 = scmp.eq.s32.totalorder %s25, 0
      %p60 = por %p58, %p59
      %p61 = scmp.ne.s32.totalorder %s47, %s48
      %p62 = scmp.eq.s32.totalorder %s26, 1
      %p63 = por %p61, %p62
      %p65 = scmp.ne.s32.totalorder %s48, %s64
      %p66 = scmp.eq.s32.totalorder %s26, 0
      %p67 = por %p65, %p66
      %s68 = ssub.s32 %s27, %s39
      %s69 = ssub.s32 %s28, %s35
      %s70 = sor.u32 %s68, %s69
      %p71 = scmp.eq.s32.totalorder %s70, 0
      %s73 = sadd.s32 %s72, 1
      %s74 = scalar_select %p71, %s72, %s73
      %p77 = pneg %p71
      %p78 = scmp.eq.s32.totalorder %s20, 1
      %p79 = por %p77, %p78
      %p80 = scmp.ne.s32.totalorder %s72, %s75
      %p81 = scmp.eq.s32.totalorder %s20, 0
      %p82 = por %p80, %p81
      %p83 = scmp.ne.s32.totalorder %s72, %s75
      %p84 = scmp.eq.s32.totalorder %s25, 1
      %p85 = por %p83, %p84
      %p86 = scmp.ne.s32.totalorder %s75, %s76
      %p87 = scmp.eq.s32.totalorder %s25, 0
      %p88 = por %p86, %p87
      %p89 = scmp.ne.s32.totalorder %s75, %s76
      %p90 = scmp.eq.s32.totalorder %s26, 1
      %p91 = por %p89, %p90
      %p93 = scmp.ne.s32.totalorder %s76, %s92
      %p94 = scmp.eq.s32.totalorder %s26, 0
      %p95 = por %p93, %p94
      %s96 = ssub.s32 %s27, %s39
      %p97 = scmp.eq.s32.totalorder %s96, 0
      %s99 = sadd.s32 %s98, 1
      %s100 = scalar_select %p97, %s98, %s99
      %p103 = pneg %p97
      %p104 = scmp.eq.s32.totalorder %s20, 1
      %p105 = por %p103, %p104
      %p106 = scmp.ne.s32.totalorder %s98, %s101
      %p107 = scmp.eq.s32.totalorder %s20, 0
      %p108 = por %p106, %p107
      %p109 = scmp.ne.s32.totalorder %s98, %s101
      %p110 = scmp.eq.s32.totalorder %s25, 1
      %p111 = por %p109, %p110
      %p112 = scmp.ne.s32.totalorder %s101, %s102
      %p113 = scmp.eq.s32.totalorder %s25, 0
      %p114 = por %p112, %p113
      %p115 = scmp.ne.s32.totalorder %s101, %s102
      %p116 = scmp.eq.s32.totalorder %s26, 1
      %p117 = por %p115, %p116
      %p119 = scmp.ne.s32.totalorder %s102, %s118
      %p120 = scmp.eq.s32.totalorder %s26, 0
      %p121 = por %p119, %p120
      %s122 = ssub.s32 %s27, %s39
      %p123 = scmp.eq.s32.totalorder %s122, 0
      %s125 = sadd.s32 %s124, 1
      %s126 = scalar_select %p123, %s124, %s125
      %p129 = pneg %p123
      %p130 = scmp.eq.s32.totalorder %s20, 1
      %p131 = por %p129, %p130
      %p132 = scmp.ne.s32.totalorder %s124, %s127
      %p133 = scmp.eq.s32.totalorder %s20, 0
      %p134 = por %p132, %p133
      %p135 = scmp.ne.s32.totalorder %s124, %s127
      %p136 = scmp.eq.s32.totalorder %s25, 1
      %p137 = por %p135, %p136
      %p138 = scmp.ne.s32.totalorder %s127, %s128
      %p139 = scmp.eq.s32.totalorder %s25, 0
      %p140 = por %p138, %p139
      %p141 = scmp.ne.s32.totalorder %s127, %s128
      %p142 = scmp.eq.s32.totalorder %s26, 1
      %p143 = por %p141, %p142
      %p145 = scmp.ne.s32.totalorder %s128, %s144
      %p146 = scmp.eq.s32.totalorder %s26, 0
      %p147 = por %p145, %p146
      %s148 = ssub.s32 %s27, %s39
      %p149 = scmp.eq.s32.totalorder %s148, 0
      %s151 = sadd.s32 %s150, 1
      %s152 = scalar_select %p149, %s150, %s151
      %p155 = pneg %p149
      %p156 = scmp.eq.s32.totalorder %s20, 1
      %p157 = por %p155, %p156
      %p158 = scmp.ne.s32.totalorder %s150, %s153
      %p159 = scmp.eq.s32.totalorder %s20, 0
      %p160 = por %p158, %p159
      %p161 = scmp.ne.s32.totalorder %s150, %s153
      %p162 = scmp.eq.s32.totalorder %s25, 1
      %p163 = por %p161, %p162
      %p164 = scmp.ne.s32.totalorder %s153, %s154
      %p165 = scmp.eq.s32.totalorder %s25, 0
      %p166 = por %p164, %p165
      %p167 = scmp.ne.s32.totalorder %s153, %s154
      %p168 = scmp.eq.s32.totalorder %s26, 1
      %p169 = por %p167, %p168
      %p171 = scmp.ne.s32.totalorder %s154, %s170
      %p172 = scmp.eq.s32.totalorder %s26, 0
      %p173 = por %p171, %p172
      %s174 = ssub.s32 %s27, %s39
      %p175 = scmp.eq.s32.totalorder %s174, 0
      %s177 = sadd.s32 %s176, 1
      %s178 = scalar_select %p175, %s176, %s177
      %p181 = pneg %p175
      %p182 = scmp.eq.s32.totalorder %s20, 1
      %p183 = por %p181, %p182
      %p184 = scmp.ne.s32.totalorder %s176, %s179
      %p185 = scmp.eq.s32.totalorder %s20, 0
      %p186 = por %p184, %p185
      %p187 = scmp.ne.s32.totalorder %s176, %s179
      %p188 = scmp.eq.s32.totalorder %s25, 1
      %p189 = por %p187, %p188
      %p190 = scmp.ne.s32.totalorder %s179, %s180
      %p191 = scmp.eq.s32.totalorder %s25, 0
      %p192 = por %p190, %p191
      %p193 = scmp.ne.s32.totalorder %s179, %s180
      %p194 = scmp.eq.s32.totalorder %s26, 1
      %p195 = por %p193, %p194
      %p197 = scmp.ne.s32.totalorder %s180, %s196
      %p198 = scmp.eq.s32.totalorder %s26, 0
      %p199 = por %p197, %p198
      %p200 = scmp.le.s32.totalorder 1, %s20
      %p201 = scmp.lt.s32.totalorder %s20, 3
      %p202 = pnand %p200, %p201
      %p203 = pneg %p202
      // Predicated region
      $region9: #{tpu_custom_call.1} parent=5 // pred_check
        _
      $region10: #{tpu_custom_call.1} parent=5 // pred_check_branch
        %205 = sbr.rel (%p202) target = $region12
      $region11: #{tpu_custom_call.1} parent=5 // pred_region
        %s206 = ssub.s32 %s20, 1
      $region12: #{tpu_custom_call.1} parent=5 // pred_fallthru
        _
      %p207 = scmp.lt.s32.totalorder %s20, 2
      // Predicated region
      $region13: #{tpu_custom_call.1} parent=5 // pred_check
        %p208 = pneg %p207
      $region14: #{tpu_custom_call.1} parent=5 // pred_check_branch
        %210 = sbr.rel (%p208) target = $region16
      $region15: #{tpu_custom_call.1} parent=5 // pred_region
        // Predicated region
        $region17: #{tpu_custom_call.1} parent=15 // pred_check
          %p211 = pneg %p54
        $region18: #{tpu_custom_call.1} parent=15 // pred_check_branch
          %213 = sbr.rel (%p211) target = $region20
        $region19: #{tpu_custom_call.1} parent=15 // pred_region
          %s214 = sand.u32 %s44, 1
          %s215 = scalar_lea.sflag [#allocation9], %s214
          %s216 = sand.u32 %s44, 1
          %s217 = smul.addr %s216, 64
          %s218 = scalar_lea.vmem [#allocation8], %s217
          %s219 = smul.u32 2, %s28
          %s221 = ssub.s32 1024, 1024
          %222 = vsyncadd %s215, %s221
          %s223 = smul.addr %s27, 8
          %s224 = sadd.s32 %s219, %s223
          %s225 = smul.addr %s224, 128
          %s226 = scalar_lea.hbm %s1, %s225
          %s227 = sshll.u32 %s218, 4
          %s228 = int_to_ptr.vmem [resolvable:$true] %s227
          %233 = dma.hbm_to_vmem [thread:$0]  %s226, 1024, %s228, %s215, 128, 128, 8
        $region20: #{tpu_custom_call.1} parent=15 // pred_fallthru
          _
        // Predicated region
        $region21: #{tpu_custom_call.1} parent=15 // pred_check
          %p234 = pneg %p82
        $region22: #{tpu_custom_call.1} parent=15 // pred_check_branch
          %236 = sbr.rel (%p234) target = $region24
        $region23: #{tpu_custom_call.1} parent=15 // pred_region
          %s237 = sand.u32 %s72, 1
          %s238 = scalar_lea.sflag [#allocation11], %s237
          %s239 = sand.u32 %s72, 1
          %s240 = smul.addr %s239, 16
          %s241 = scalar_lea.vmem [#allocation10], %s240
          %s242 = smul.u32 2, %s28
          %s244 = ssub.s32 256, 256
          %245 = vsyncadd %s238, %s244
          %s246 = smul.addr %s27, 2
          %s247 = sadd.s32 %s242, %s246
          %s248 = smul.addr %s247, 128
          %s249 = scalar_lea.hbm %s2, %s248
          %s250 = sshll.u32 %s241, 4
          %s251 = int_to_ptr.vmem [resolvable:$true] %s250
          %256 = dma.hbm_to_vmem [thread:$0]  %s249, 256, %s251, %s238, 128, 128, 8
        $region24: #{tpu_custom_call.1} parent=15 // pred_fallthru
          _
      $region16: #{tpu_custom_call.1} parent=5 // pred_fallthru
        _
      %p257 = scmp.le.s32.totalorder 1, %s20
      %p258 = scmp.lt.s32.totalorder %s20, 3
      %p259 = pnand %p257, %p258
      %p260 = pneg %p259
      // Predicated region
      $region25: #{tpu_custom_call.1} parent=5 // pred_check
        _
      $region26: #{tpu_custom_call.1} parent=5 // pred_check_branch
        %262 = sbr.rel (%p259) target = $region28
      $region27: #{tpu_custom_call.1} parent=5 // pred_region
        %s263 = ssub.s32 %s20, 1
        %s264 = sand.u32 %s47, 1
        %s265 = scalar_lea.sflag [#allocation9], %s264
        %s266 = sand.u32 %s47, 1
        %s267 = smul.addr %s266, 64
        %s268 = scalar_lea.vmem [#allocation8], %s267
        // Predicated region
        $region29: #{tpu_custom_call.1} parent=27 // pred_check
          %p269 = pneg %p60
        $region30: #{tpu_custom_call.1} parent=27 // pred_check_branch
          %271 = sbr.rel (%p269) target = $region32
        $region31: #{tpu_custom_call.1} parent=27 // pred_region
          %272 = dma.done %s265, 1024
        $region32: #{tpu_custom_call.1} parent=27 // pred_fallthru
          _
        %s273 = sand.u32 %s75, 1
        %s274 = scalar_lea.sflag [#allocation11], %s273
        %s275 = sand.u32 %s75, 1
        %s276 = smul.addr %s275, 16
        %s277 = scalar_lea.vmem [#allocation10], %s276
        // Predicated region
        $region33: #{tpu_custom_call.1} parent=27 // pred_check
          %p278 = pneg %p88
        $region34: #{tpu_custom_call.1} parent=27 // pred_check_branch
          %280 = sbr.rel (%p278) target = $region36
        $region35: #{tpu_custom_call.1} parent=27 // pred_region
          %281 = dma.done %s274, 256
        $region36: #{tpu_custom_call.1} parent=27 // pred_fallthru
          _
        %s282 = sand.u32 %s47, 1
        %s283 = scalar_lea.sflag [#allocation9], %s282
        %s284 = sand.u32 %s47, 1
        %s285 = smul.addr %s284, 64
        %s286 = scalar_lea.vmem [#allocation8], %s285
        %p287 = pneg %p60
        %p288 = pneg %p57
        %s289 = sand.u32 %s75, 1
        %s290 = scalar_lea.sflag [#allocation11], %s289
        %s291 = sand.u32 %s75, 1
        %s292 = smul.addr %s291, 16
        %s293 = scalar_lea.vmem [#allocation10], %s292
        %p294 = pneg %p88
        %p295 = pneg %p85
        %p296 = pneg %p114
        %p297 = pneg %p111
        %p298 = scmp.lt.s32.totalorder %s29, 1
        %s299 = scalar_select %p298, %s29, 1
        %s300 = scalar_lea.vmem %s3, %s299
        %p301 = pneg %p140
        %p302 = pneg %p137
        %p303 = scmp.lt.s32.totalorder %s29, 1
        %s304 = scalar_select %p303, %s29, 1
        %s305 = scalar_lea.vmem %s4, %s304
        %p306 = pneg %p166
        %p307 = pneg %p163
        %p308 = scmp.lt.s32.totalorder %s29, 1
        %s309 = scalar_select %p308, %s29, 1
        %s310 = scalar_lea.vmem %s5, %s309
        %p311 = pneg %p192
        %p312 = pneg %p189
        %p313 = scmp.lt.s32.totalorder %s29, 1
        %s314 = scalar_select %p313, %s29, 1
        %s315 = scalar_lea.vmem %s6, %s314
        %s316 = smul.u32 2, %s30
        %s317 = smul.u32 2, %s30
        %p318 = scmp.lt.s32.totalorder %s29, 1
        %s319 = scalar_select %p318, %s29, 1
        %s320 = scalar_lea.vmem %s3, %s319
        %p321 = scmp.lt.s32.totalorder %s29, 1
        %s322 = scalar_select %p321, %s29, 1
        %s323 = scalar_lea.vmem %s4, %s322
        %p324 = scmp.lt.s32.totalorder %s29, 1
        %s325 = scalar_select %p324, %s29, 1
        %s326 = scalar_lea.vmem %s5, %s325
        %p327 = scmp.lt.s32.totalorder %s29, 1
        %s328 = scalar_select %p327, %s29, 1
        %s329 = scalar_lea.vmem %s6, %s328
        %p330 = scmp.eq.s32.totalorder %s30, 0
        // Predicated region
        $region37: #{tpu_custom_call.1} parent=27 // pred_check
          %p331 = pneg %p330
        $region38: #{tpu_custom_call.1} parent=27 // pred_check_branch
          %333 = sbr.rel (%p331) target = $region40
        $region39: #{tpu_custom_call.1} parent=27 // pred_region
          %vm334 = vcmask 130048
          %335 = vst.msk [vmem:[#allocation2] sm:$0xff] %vm334, 0.0
          %336 = vst.msk [vmem:[#allocation2 + $0x8] sm:$0xff] %vm334, 0.0
          %337 = vst.msk [vmem:[#allocation3] sm:$0xff] %vm334, 0.0
          %338 = vst.msk [vmem:[#allocation3 + $0x8] sm:$0xff] %vm334, 0.0
          %339 = vst.msk [vmem:[#allocation4] sm:$0xff] %vm334, 0.0
          %340 = vst.msk [vmem:[#allocation4 + $0x8] sm:$0xff] %vm334, 0.0
          %341 = vst.msk [vmem:[#allocation5] sm:$0xff] %vm334, 0.0
          %342 = vst.msk [vmem:[#allocation5 + $0x8] sm:$0xff] %vm334, 0.0
        $region40: #{tpu_custom_call.1} parent=27 // pred_fallthru
          _
        %v343 = vld [vmem:[%s277] sm:$0xff]
        %v344 = vld [vmem:[%s277 + $0x8] sm:$0xff]
        %v345 = vlaneseq
        %v346 = vshrl.u32 %v345, 7
        %v347 = vadd.s32 %v346, 8
        %s348 = smul.u32 %s30, 16
        %v349 = vstv %s348
        %v350 = vadd.s32 %v346, %v349
        %v351 = vadd.s32 %v347, %v349
        %vm352 = vcmp.lt.s32.totalorder %v350, 16
        %vm353 = vcmp.lt.s32.totalorder %v351, 16
        %vm354 = vcmp.ne.s32.totalorder %v343, 4294967196
        %vm355 = vcmp.ne.s32.totalorder %v344, 4294967196
        %vm356 = vmand %vm352, %vm354
        %vm357 = vmand %vm353, %vm355
        %v358 = vsel %vm356, 1, 0
        %v359 = vsel %vm357, 1, 0
        %v360 = vcvt.s32.f32 %v358
        %v361 = vcvt.s32.f32 %v359
        %v362 = vld [vmem:[%s268] sm:$0xff]
        %v363 = vld [vmem:[%s268 + $0x8] sm:$0xff]
        %s364 = scalar_lea.vmem %s268, 16 [#allocation8]
        %v365 = vld [vmem:[%s364] sm:$0xff]
        %v366 = vld [vmem:[%s364 + $0x8] sm:$0xff]
        %v367 = vmax.f32 %v362, %v365
        %v368 = vmax.f32 %v363, %v366
        %s369 = scalar_lea.vmem %s268, 32 [#allocation8]
        %v370 = vld [vmem:[%s369] sm:$0xff]
        %v371 = vld [vmem:[%s369 + $0x8] sm:$0xff]
        %v372 = vmax.f32 %v367, %v370
        %v373 = vmax.f32 %v368, %v371
        %s374 = scalar_lea.vmem %s268, 48 [#allocation8]
        %v375 = vld [vmem:[%s374] sm:$0xff]
        %v376 = vld [vmem:[%s374 + $0x8] sm:$0xff]
        %v377 = vmax.f32 %v372, %v375
        %v378 = vmax.f32 %v373, %v376
        %v379 = vsub.f32 %v362, %v377
        %v380 = vsub.f32 %v363, %v378
        %v381 = vmul.f32 %v379, 1.442695
        %v382 = vpow.pop %v381
        %v383 = vmul.f32 %v380, 1.442695
        %v384 = vpow.pop %v383
        %v385 = vadd.f32 %v382, 0.0
        %v386 = vadd.f32 %v384, 0.0
        %vm387 = vcmp.eq.s32.totalorder %v343, 0
        %vm388 = vcmp.eq.s32.totalorder %v344, 0
        %v389 = vsel %vm387, %v362, 0.0
        %v390 = vsel %vm388, %v363, 0.0
        %v391 = vsub.f32 %v365, %v377
        %v392 = vsub.f32 %v366, %v378
        %v393 = vmul.f32 %v391, 1.442695
        %v394 = vpow.pop %v393
        %v395 = vmul.f32 %v392, 1.442695
        %v396 = vpow.pop %v395
        %v397 = vadd.f32 %v385, %v394
        %v398 = vadd.f32 %v386, %v396
        %vm399 = vcmp.eq.s32.totalorder %v343, 1
        %vm400 = vcmp.eq.s32.totalorder %v344, 1
        %v401 = vsel %vm399, %v365, %v389
        %v402 = vsel %vm400, %v366, %v390
        %v403 = vsub.f32 %v370, %v377
        %v404 = vsub.f32 %v371, %v378
        %v405 = vmul.f32 %v403, 1.442695
        %v406 = vpow.pop %v405
        %v407 = vmul.f32 %v404, 1.442695
        %v408 = vpow.pop %v407
        %v409 = vadd.f32 %v397, %v406
        %v410 = vadd.f32 %v398, %v408
        %vm411 = vcmp.eq.s32.totalorder %v343, 2
        %vm412 = vcmp.eq.s32.totalorder %v344, 2
        %v413 = vsel %vm411, %v370, %v401
        %v414 = vsel %vm412, %v371, %v402
        %v415 = vsub.f32 %v375, %v377
        %v416 = vsub.f32 %v376, %v378
        %v417 = vmul.f32 %v415, 1.442695
        %v418 = vpow.pop %v417
        %v419 = vmul.f32 %v416, 1.442695
        %v420 = vpow.pop %v419
        %v421 = vadd.f32 %v409, %v418
        %v422 = vadd.f32 %v410, %v420
        %vm423 = vcmp.eq.s32.totalorder %v343, 3
        %vm424 = vcmp.eq.s32.totalorder %v344, 3
        %v425 = vsel %vm423, %v375, %v413
        %v426 = vsel %vm424, %v376, %v414
        %v427 = vlog2.pop %v421
        %v428 = vmul.f32 %v427, 0.6931472
        %v429 = vlog2.pop %v422
        %v430 = vmul.f32 %v429, 0.6931472
        %v431 = vadd.f32 %v377, %v428
        %v432 = vadd.f32 %v378, %v430
        %v433 = vsub.f32 %v431, %v425
        %v434 = vsub.f32 %v432, %v426
        %v435 = vsel %vm356, %v433, 0.0
        %v436 = vsel %vm357, %v434, 0.0
        %v437 = vld [vmem:[#allocation3] sm:$0xff]
        %v438 = vld [vmem:[#allocation3 + $0x8] sm:$0xff]
        %v439 = vadd.f32 %v437, %v435
        %v440 = vadd.f32 %v438, %v436
        %vm441 = vcmask 130048
        %442 = vst.msk [vmem:[#allocation3] sm:$0xff] %vm441, %v439
        %443 = vst.msk [vmem:[#allocation3 + $0x8] sm:$0xff] %vm441, %v440
        %v444 = vld [vmem:[#allocation4] sm:$0xff]
        %v445 = vld [vmem:[#allocation4 + $0x8] sm:$0xff]
        %v446 = vadd.f32 %v444, %v360
        %v447 = vadd.f32 %v445, %v361
        %448 = vst.msk [vmem:[#allocation4] sm:$0xff] %vm441, %v446
        %449 = vst.msk [vmem:[#allocation4 + $0x8] sm:$0xff] %vm441, %v447
        %s450 = sld [smem:[#allocation7]]
        %p451 = scmp.lt.s32.totalorder %s29, %s450
        // Predicated region
        $region41: #{tpu_custom_call.1} parent=27 // pred_check
          %p452 = pneg %p451
        $region42: #{tpu_custom_call.1} parent=27 // pred_check_branch
          %454 = sbr.rel (%p452) target = $region44
        $region43: #{tpu_custom_call.1} parent=27 // pred_region
          %v455 = vmul.f32 %v433, -5.0
          %v456 = vmul.f32 %v434, -5.0
          %v457 = vmul.f32 %v455, 1.442695
          %v458 = vpow.pop %v457
          %v459 = vmul.f32 %v456, 1.442695
          %v460 = vpow.pop %v459
          %v461 = vsel %vm356, %v458, 0.0
          %v462 = vsel %vm357, %v460, 0.0
          %v463 = vld [vmem:[#allocation2] sm:$0xff]
          %v464 = vld [vmem:[#allocation2 + $0x8] sm:$0xff]
          %v465 = vmul.f32 %v435, %v461
          %v466 = vmul.f32 %v436, %v462
          %v467 = vadd.f32 %v463, %v465
          %v468 = vadd.f32 %v464, %v466
          %469 = vst.msk [vmem:[#allocation2] sm:$0xff] %vm441, %v467
          %470 = vst.msk [vmem:[#allocation2 + $0x8] sm:$0xff] %vm441, %v468
          %v471 = vld [vmem:[#allocation5] sm:$0xff]
          %v472 = vld [vmem:[#allocation5 + $0x8] sm:$0xff]
          %v473 = vadd.f32 %v471, %v461
          %v474 = vadd.f32 %v472, %v462
          %475 = vst.msk [vmem:[#allocation5] sm:$0xff] %vm441, %v473
          %476 = vst.msk [vmem:[#allocation5 + $0x8] sm:$0xff] %vm441, %v474
        $region44: #{tpu_custom_call.1} parent=27 // pred_fallthru
          _
        %p477 = scmp.ge.s32.totalorder %s29, %s450
        // Predicated region
        $region45: #{tpu_custom_call.1} parent=27 // pred_check
          %p478 = pneg %p477
        $region46: #{tpu_custom_call.1} parent=27 // pred_check_branch
          %480 = sbr.rel (%p478) target = $region48
        $region47: #{tpu_custom_call.1} parent=27 // pred_region
          %v481 = vld [vmem:[#allocation2] sm:$0xff]
          %v482 = vld [vmem:[#allocation2 + $0x8] sm:$0xff]
          %v483 = vadd.f32 %v481, %v435
          %v484 = vadd.f32 %v482, %v436
          %485 = vst.msk [vmem:[#allocation2] sm:$0xff] %vm441, %v483
          %486 = vst.msk [vmem:[#allocation2 + $0x8] sm:$0xff] %vm441, %v484
          %v487 = vld [vmem:[#allocation5] sm:$0xff]
          %v488 = vld [vmem:[#allocation5 + $0x8] sm:$0xff]
          %v489 = vadd.f32 %v487, %v360
          %v490 = vadd.f32 %v488, %v361
          %491 = vst.msk [vmem:[#allocation5] sm:$0xff] %vm441, %v489
          %492 = vst.msk [vmem:[#allocation5 + $0x8] sm:$0xff] %vm441, %v490
        $region48: #{tpu_custom_call.1} parent=27 // pred_fallthru
          _
        // Predicated region
        $region49: #{tpu_custom_call.1} parent=27 // pred_check
          %p493 = pneg %p330
        $region50: #{tpu_custom_call.1} parent=27 // pred_check_branch
          %495 = sbr.rel (%p493) target = $region52
        $region51: #{tpu_custom_call.1} parent=27 // pred_region
          %v496 = vld [vmem:[#allocation2] sm:$0xff]
          %v497 = vld [vmem:[#allocation2 + $0x8] sm:$0xff]
          %v498 = vsel %vm441, %v496, 0.0
          %v499 = vsel %vm441, %v497, 0.0
          %v500 = vadd.f32 %v498, %v499
          %501 = vadd.xlane.f32.xlu0 %v500
          %v502 = vpop.xlane.xlu0 %501
          %v503 = vrot.slane %v502, 4
          %v504 = vadd.f32 %v502, %v503
          %v505 = vrot.slane %v504, 2
          %v506 = vadd.f32 %v504, %v505
          %v507 = vrot.slane %v506, 1
          %v508 = vadd.f32 %v506, %v507
          %s509 = vtos %v508
          %v510 = vstv %s509
          %vm511 = vcmask 0
          %512 = vst.msk [vmem:[%s320] sm:$0x1] %vm511, %v510
          %v513 = vld [vmem:[#allocation3] sm:$0xff]
          %v514 = vld [vmem:[#allocation3 + $0x8] sm:$0xff]
          %v515 = vsel %vm441, %v513, 0.0
          %v516 = vsel %vm441, %v514, 0.0
          %v517 = vadd.f32 %v515, %v516
          %518 = vadd.xlane.f32.xlu0 %v517
          %v519 = vpop.xlane.xlu0 %518
          %v520 = vrot.slane %v519, 4
          %v521 = vadd.f32 %v519, %v520
          %v522 = vrot.slane %v521, 2
          %v523 = vadd.f32 %v521, %v522
          %v524 = vrot.slane %v523, 1
          %v525 = vadd.f32 %v523, %v524
          %s526 = vtos %v525
          %v527 = vstv %s526
          %528 = vst.msk [vmem:[%s323] sm:$0x1] %vm511, %v527
          %v529 = vld [vmem:[#allocation4] sm:$0xff]
          %v530 = vld [vmem:[#allocation4 + $0x8] sm:$0xff]
          %v531 = vsel %vm441, %v529, 0.0
          %v532 = vsel %vm441, %v530, 0.0
          %v533 = vadd.f32 %v531, %v532
          %534 = vadd.xlane.f32.xlu0 %v533
          %v535 = vpop.xlane.xlu0 %534
          %v536 = vrot.slane %v535, 4
          %v537 = vadd.f32 %v535, %v536
          %v538 = vrot.slane %v537, 2
          %v539 = vadd.f32 %v537, %v538
          %v540 = vrot.slane %v539, 1
          %v541 = vadd.f32 %v539, %v540
          %s542 = vtos %v541
          %v543 = vstv %s542
          %544 = vst.msk [vmem:[%s326] sm:$0x1] %vm511, %v543
          %v545 = vld [vmem:[#allocation5] sm:$0xff]
          %v546 = vld [vmem:[#allocation5 + $0x8] sm:$0xff]
          %v547 = vsel %vm441, %v545, 0.0
          %v548 = vsel %vm441, %v546, 0.0
          %v549 = vadd.f32 %v547, %v548
          %550 = vadd.xlane.f32.xlu0 %v549
          %v551 = vpop.xlane.xlu0 %550
          %v552 = vrot.slane %v551, 4
          %v553 = vadd.f32 %v551, %v552
          %v554 = vrot.slane %v553, 2
          %v555 = vadd.f32 %v553, %v554
          %v556 = vrot.slane %v555, 1
          %v557 = vadd.f32 %v555, %v556
          %s558 = vtos %v557
          %v559 = vstv %s558
          %560 = vst.msk [vmem:[%s329] sm:$0x1] %vm511, %v559
        $region52: #{tpu_custom_call.1} parent=27 // pred_fallthru
          _
        %p561 = scmp.lt.s32.totalorder %s29, 1
        %s562 = scalar_select %p561, %s29, 1
        %s563 = scalar_lea.vmem %s3, %s562
        %p564 = scmp.lt.s32.totalorder %s29, 1
        %s565 = scalar_select %p564, %s29, 1
        %s566 = scalar_lea.vmem %s4, %s565
        %p567 = scmp.lt.s32.totalorder %s29, 1
        %s568 = scalar_select %p567, %s29, 1
        %s569 = scalar_lea.vmem %s5, %s568
        %p570 = scmp.lt.s32.totalorder %s29, 1
        %s571 = scalar_select %p570, %s29, 1
        %s572 = scalar_lea.vmem %s6, %s571
        // Predicated region
        $region53: #{tpu_custom_call.1} parent=27 // pred_check
          %p573 = pneg %p111
        $region54: #{tpu_custom_call.1} parent=27 // pred_check_branch
          %575 = sbr.rel (%p573) target = $region56
        $region55: #{tpu_custom_call.1} parent=27 // pred_region
          _
        $region56: #{tpu_custom_call.1} parent=27 // pred_fallthru
          _
        // Predicated region
        $region57: #{tpu_custom_call.1} parent=27 // pred_check
          %p576 = pneg %p137
        $region58: #{tpu_custom_call.1} parent=27 // pred_check_branch
          %578 = sbr.rel (%p576) target = $region60
        $region59: #{tpu_custom_call.1} parent=27 // pred_region
          _
        $region60: #{tpu_custom_call.1} parent=27 // pred_fallthru
          _
        // Predicated region
        $region61: #{tpu_custom_call.1} parent=27 // pred_check
          %p579 = pneg %p163
        $region62: #{tpu_custom_call.1} parent=27 // pred_check_branch
          %581 = sbr.rel (%p579) target = $region64
        $region63: #{tpu_custom_call.1} parent=27 // pred_region
          _
        $region64: #{tpu_custom_call.1} parent=27 // pred_fallthru
          _
        // Predicated region
        $region65: #{tpu_custom_call.1} parent=27 // pred_check
          %p582 = pneg %p189
        $region66: #{tpu_custom_call.1} parent=27 // pred_check_branch
          %584 = sbr.rel (%p582) target = $region68
        $region67: #{tpu_custom_call.1} parent=27 // pred_region
          _
        $region68: #{tpu_custom_call.1} parent=27 // pred_fallthru
          _
      $region28: #{tpu_custom_call.1} parent=5 // pred_fallthru
        _
      %p585 = scmp.le.s32.totalorder 2, %s20
      // Predicated region
      $region69: #{tpu_custom_call.1} parent=5 // pred_check
        %p586 = pneg %p585
      $region70: #{tpu_custom_call.1} parent=5 // pred_check_branch
        %588 = sbr.rel (%p586) target = $region72
      $region71: #{tpu_custom_call.1} parent=5 // pred_region
        %s589 = ssub.s32 %s20, 2
        // Predicated region
        $region73: #{tpu_custom_call.1} parent=71 // pred_check
          %p590 = pneg %p117
        $region74: #{tpu_custom_call.1} parent=71 // pred_check_branch
          %592 = sbr.rel (%p590) target = $region76
        $region75: #{tpu_custom_call.1} parent=71 // pred_region
          %p593 = scmp.lt.s32.totalorder %s31, 1
          %s594 = scalar_select %p593, %s31, 1
          %s595 = scalar_lea.vmem %s3, %s594
        $region76: #{tpu_custom_call.1} parent=71 // pred_fallthru
          _
        // Predicated region
        $region77: #{tpu_custom_call.1} parent=71 // pred_check
          %p596 = pneg %p143
        $region78: #{tpu_custom_call.1} parent=71 // pred_check_branch
          %598 = sbr.rel (%p596) target = $region80
        $region79: #{tpu_custom_call.1} parent=71 // pred_region
          %p599 = scmp.lt.s32.totalorder %s31, 1
          %s600 = scalar_select %p599, %s31, 1
          %s601 = scalar_lea.vmem %s4, %s600
        $region80: #{tpu_custom_call.1} parent=71 // pred_fallthru
          _
        // Predicated region
        $region81: #{tpu_custom_call.1} parent=71 // pred_check
          %p602 = pneg %p169
        $region82: #{tpu_custom_call.1} parent=71 // pred_check_branch
          %604 = sbr.rel (%p602) target = $region84
        $region83: #{tpu_custom_call.1} parent=71 // pred_region
          %p605 = scmp.lt.s32.totalorder %s31, 1
          %s606 = scalar_select %p605, %s31, 1
          %s607 = scalar_lea.vmem %s5, %s606
        $region84: #{tpu_custom_call.1} parent=71 // pred_fallthru
          _
        // Predicated region
        $region85: #{tpu_custom_call.1} parent=71 // pred_check
          %p608 = pneg %p195
        $region86: #{tpu_custom_call.1} parent=71 // pred_check_branch
          %610 = sbr.rel (%p608) target = $region88
        $region87: #{tpu_custom_call.1} parent=71 // pred_region
          %p611 = scmp.lt.s32.totalorder %s31, 1
          %s612 = scalar_select %p611, %s31, 1
          %s613 = scalar_lea.vmem %s6, %s612
        $region88: #{tpu_custom_call.1} parent=71 // pred_fallthru
          _
      $region72: #{tpu_custom_call.1} parent=5 // pred_fallthru
        _
    $region6: #{tpu_custom_call.1} parent=1 // loop_footer
      %s24 = sadd.s32 1, %s20
    $region7: #{tpu_custom_call.1} parent=1 // loop_footer_branch
      %19 = sbr.rel target = $region3
    $region8: #{tpu_custom_call.1} parent=1 // loop_exit
      _
    %614 = vsyncpa [#allocation9], 1
    %s615 = scalar_lea.sflag [#allocation9], 1
    %616 = vsyncpa %s615, 1
    %617 = vsyncpa [#allocation11], 1
    %s618 = scalar_lea.sflag [#allocation11], 1
    %619 = vsyncpa %s618, 1

</llo_original>
